<compile_context>
chip_gen: v7x
topology: tpu7x:2x2x1
jax: 0.10.0
libtpu: 0.0.40
codegen_flags: <defaults>
</compile_context>

<pallas_src>
import math

import jax
import jax.numpy as jnp
from jax.experimental import pallas as pl
from jax.experimental.pallas import tpu as pltpu


def _make_dueling_kernel(n_hidden):
    """Fused kernel: n_hidden ReLU Linear layers + folded dueling head.

    Transposed (lane-dense) layout: activations live as (features, tb) tiles.
    Weights are PyTorch-native (out_features, in_features); biases are
    (out_features, 1) f32 columns so the bias-add broadcasts over lanes.
    Matmuls accumulate in f32; in bf16 mode only the MXU inputs are bf16
    (f32 elementwise epilogue keeps v5e's non-bf16 VPU happy).
    """

    def kernel(*refs):
        x_ref = refs[0]          # (tb, S)  batch-major input tile
        out_ref = refs[-1]       # (A, tb)  transposed, lane-dense output tile
        p = refs[1:-1]           # (w, b) * n_hidden, then (w_head, b_head)

        # Layer 1: h^T = relu(W1 @ x^T + b1). The input-tile transpose is
        # folded into the contraction (XLU/MXU) — no wrapper-side transpose.
        w0 = p[0][...]
        h = jax.lax.dot_general(
            w0, x_ref[...], (((1,), (1,)), ((), ())),
            preferred_element_type=jnp.float32)
        h = jnp.maximum(h + p[1][...], 0.0)

        idx = 2
        for _ in range(n_hidden - 1):
            w = p[idx][...]
            b = p[idx + 1][...]
            idx += 2
            h = jnp.dot(w, h.astype(w.dtype), preferred_element_type=jnp.float32)
            h = jnp.maximum(h + b, 0.0)

        w_head = p[idx][...]
        b_head = p[idx + 1][...]
        o = jnp.dot(w_head, h.astype(w_head.dtype),
                    preferred_element_type=jnp.float32) + b_head
        out_ref[...] = o.astype(out_ref.dtype)

    return kernel


def _pick_batch_tile(batch, max_tile):
    """Choose (tb, padded_batch).

    tb is either the full batch (single tile; full-dim blocks always satisfy
    the (8,128) rule, no padding) or a multiple of 128 that divides the batch
    (lane-dense transposed output tile, and >= 2 grid steps so both v7x
    TensorCores get work).  Padding is a last resort for huge batches with no
    multiple-of-128 divisor (RL batches are normally powers of two).
    """
    max_tile = max(128, int(max_tile))
    if batch <= 256:
        return batch, batch
    cap = max(128, min(max_tile, (batch // 2) // 128 * 128))
    t = cap
    while t >= 128:
        if batch % t == 0:
            return t, batch
        t -= 128
    if batch <= 4096:
        return batch, batch          # single full tile, still no pad
    batch_pad = pl.cdiv(batch, 128) * 128
    t = cap
    while t >= 128:
        if batch_pad % t == 0:
            return t, batch_pad
        t -= 128
    return 128, batch_pad


def dueling_q_net_forward(state, params, action_size, *,
                          batch_tile=1024, compute_dtype=jnp.float32):
    """Exact Dueling_Q_Net forward.

    params:
      'layers': [(W, b), ...]   W: (out, in)   b: (out, 1)   (PyTorch-native)
      'state' : (W_s, b_s)      W_s: (1, H)    b_s: (1, 1)
      'action': (W_a, b_a)      W_a: (A, H)    b_a: (A, 1)

    The dueling head  s + (a - (1/A)*a) = s + (1 - 1/A)*a  is folded into a
    single (A, H) matmul on the host side.
    """
    layers = params["layers"]
    w_s, b_s = params["state"]
    w_a, b_a = params["action"]
    hidden = w_a.shape[1]

    scale = 1.0 - 1.0 / action_size
    w_head = jnp.broadcast_to(w_s, (action_size, hidden)) + scale * w_a   # (A, H)
    b_head = b_s + scale * b_a                                            # (A, 1)

    batch, state_size = state.shape
    tb, batch_pad = _pick_batch_tile(batch, batch_tile)

    x_in = state.astype(compute_dtype)
    if batch_pad != batch:
        # Rare fallback only (huge batch with no multiple-of-128 divisor).
        x_in = jnp.pad(x_in, ((0, batch_pad - batch), (0, 0)))

    inputs = [x_in]
    for (w, b) in layers:
        inputs.extend([w.astype(compute_dtype), b.astype(jnp.float32)])
    inputs.extend([w_head.astype(compute_dtype), b_head.astype(jnp.float32)])

    # Activation tile walks the batch; weights/biases use constant index maps
    # so Pallas keeps them resident in VMEM instead of re-DMAing each step.
    in_specs = [pl.BlockSpec((tb, state_size), lambda i: (i, 0))]
    for a in inputs[1:]:
        in_specs.append(pl.BlockSpec(a.shape, lambda i: (0, 0)))

    # Transposed (A, batch) output: the batch tile sits on the 128-lane axis,
    # so stores are unmasked full-lane vst's instead of 4/128 masked stores.
    out_shape = jax.ShapeDtypeStruct((action_size, batch_pad), jnp.float32)
    out_spec = pl.BlockSpec((action_size, tb), lambda i: (0, i))

    flops = 2 * batch_pad * sum(int(w.shape[0]) * int(w.shape[1])
                                for (w, _) in layers)
    flops += 2 * batch_pad * action_size * hidden
    bytes_accessed = sum(int(a.size) * a.dtype.itemsize for a in inputs)
    bytes_accessed += action_size * batch_pad * 4

    out = pl.pallas_call(
        _make_dueling_kernel(len(layers)),
        grid=(batch_pad // tb,),
        in_specs=in_specs,
        out_specs=out_spec,
        out_shape=out_shape,
        compiler_params=pltpu.CompilerParams(
            dimension_semantics=("parallel",)),
        cost_estimate=pl.CostEstimate(
            flops=flops, transcendentals=0, bytes_accessed=bytes_accessed),
    )(*inputs)

    return out[:, :batch].T   # tiny (A, B) -> (B, A) transpose


def init_params(key, state_size, hidden_layers, action_size):
    """nn.Linear-style init: U(+/- 1/sqrt(fan_in)).

    Weights are PyTorch-native (out_features, in_features); biases (out, 1).
    """
    def linear(k, fan_in, fan_out):
        kw, kb = jax.random.split(k)
        bound = 1.0 / math.sqrt(fan_in)
        w = jax.random.uniform(kw, (fan_out, fan_in), jnp.float32, -bound, bound)
        b = jax.random.uniform(kb, (fan_out, 1), jnp.float32, -bound, bound)
        return w, b

    dims = [state_size] + list(hidden_layers)
    keys = jax.random.split(key, len(hidden_layers) + 2)
    layers = [linear(keys[i], dims[i], dims[i + 1])
              for i in range(len(hidden_layers))]
    return {"layers": layers,
            "state": linear(keys[-2], hidden_layers[-1], 1),
            "action": linear(keys[-1], hidden_layers[-1], action_size)}


def reference_forward(state, params, action_size):
    """Un-folded forward, exactly as the PyTorch module writes it (f32)."""
    x = state
    for (w, b) in params["layers"]:
        x = jnp.maximum(x @ w.T + b[:, 0], 0.0)
    w_s, b_s = params["state"]
    w_a, b_a = params["action"]
    s = x @ w_s.T + b_s[:, 0]
    a = x @ w_a.T + b_a[:, 0]
    return s + (a - (1.0 / action_size) * a)


if __name__ == "__main__":
    # Module config: Dueling_Q_Net(state_size, hidden_layer_size, hidden_layers, action_size)
    state_size = 16
    hidden_layers = [32, 32]        # hidden_layer_size == len(hidden_layers) == 2
    action_size = 4

    key = jax.random.PRNGKey(0)
    k_x, k_p, k_x2 = jax.random.split(key, 3)
    params = init_params(k_p, state_size, hidden_layers, action_size)

    # Case 1: tiny batch — single full tile, no padding.
    state_small = jax.random.normal(k_x, (8, state_size), dtype=jnp.float32)
    out_small = jax.block_until_ready(
        dueling_q_net_forward(state_small, params, action_size))
    ref_small = reference_forward(state_small, params, action_size)
    assert out_small.shape == (8, action_size)
    assert bool(jnp.allclose(out_small, ref_small, atol=1e-4, rtol=1e-4))

    # Case 2: larger batch — multi-step grid (pipelined; megacore-shardable on v7x).
    state_big = jax.random.normal(k_x2, (512, state_size), dtype=jnp.float32)
    out_big = jax.block_until_ready(
        dueling_q_net_forward(state_big, params, action_size))
    ref_big = reference_forward(state_big, params, action_size)
    assert out_big.shape == (512, action_size)
    assert bool(jnp.allclose(out_big, ref_big, atol=1e-4, rtol=1e-4))

    # Case 3: bf16 compute stream (v6e/v7x HBM-traffic halving), f32 accumulate.
    out_bf16 = jax.block_until_ready(
        dueling_q_net_forward(state_big, params, action_size,
                              compute_dtype=jnp.bfloat16))
    assert bool(jnp.allclose(out_bf16, ref_big, atol=5e-2, rtol=5e-2))

    print("KERNEL_OK")
</pallas_src>

<mosaic_0001>
module attributes {stable_mosaic.version = 11 : i64} {
  func.func @kernel(%arg0: i32, %arg1: memref<8x16xf32, #tpu.memory_space<vmem>>, %arg2: memref<32x16xf32, #tpu.memory_space<vmem>>, %arg3: memref<32x1xf32, #tpu.memory_space<vmem>>, %arg4: memref<32x32xf32, #tpu.memory_space<vmem>>, %arg5: memref<32x1xf32, #tpu.memory_space<vmem>>, %arg6: memref<4x32xf32, #tpu.memory_space<vmem>>, %arg7: memref<4x1xf32, #tpu.memory_space<vmem>>, %arg8: memref<4x8xf32, #tpu.memory_space<vmem>>) attributes {dimension_semantics = [#tpu.dimension_semantics<parallel>], iteration_bounds = array<i64: 1>, scalar_prefetch = 0 : i64, scratch_operands = 0 : i64, tpu.core_type = #tpu.core_type<tc>, window_params = [{transform_indices = @transform_0, window_bounds = array<i64: 8, 16>}, {pipeline_mode = #tpu.pipeline_mode<synchronous>, transform_indices = @transform_1, window_bounds = array<i64: 32, 16>}, {pipeline_mode = #tpu.pipeline_mode<synchronous>, transform_indices = @transform_2, window_bounds = array<i64: 32, 1>}, {pipeline_mode = #tpu.pipeline_mode<synchronous>, transform_indices = @transform_3, window_bounds = array<i64: 32, 32>}, {pipeline_mode = #tpu.pipeline_mode<synchronous>, transform_indices = @transform_4, window_bounds = array<i64: 32, 1>}, {pipeline_mode = #tpu.pipeline_mode<synchronous>, transform_indices = @transform_5, window_bounds = array<i64: 4, 32>}, {pipeline_mode = #tpu.pipeline_mode<synchronous>, transform_indices = @transform_6, window_bounds = array<i64: 4, 1>}, {transform_indices = @transform_7, window_bounds = array<i64: 4, 8>}]} {
    %c0 = arith.constant 0 : index
    %c0_0 = arith.constant 0 : index
    %0 = vector.load %arg2[%c0, %c0_0] : memref<32x16xf32, #tpu.memory_space<vmem>>, vector<32x16xf32>
    %c0_1 = arith.constant 0 : index
    %c0_2 = arith.constant 0 : index
    %1 = vector.load %arg1[%c0_1, %c0_2] : memref<8x16xf32, #tpu.memory_space<vmem>>, vector<8x16xf32>
    %cst = arith.constant dense<0.000000e+00> : vector<32x8xf32>
    %2 = tpu.matmul %0, %1, %cst {dimension_numbers = #tpu.dot_dimension_numbers<[1], [1], [0], [0], [0, 0, 1, 0], [], []>} : vector<32x16xf32>, vector<8x16xf32>, vector<32x8xf32> -> vector<32x8xf32>
    %c0_3 = arith.constant 0 : index
    %c0_4 = arith.constant 0 : index
    %3 = vector.load %arg3[%c0_3, %c0_4] : memref<32x1xf32, #tpu.memory_space<vmem>>, vector<32x1xf32>
    %4 = vector.broadcast %3 : vector<32x1xf32> to vector<32x8xf32>
    %5 = arith.addf %2, %4 : vector<32x8xf32>
    %cst_5 = arith.constant 0.000000e+00 : f32
    %6 = vector.broadcast %cst_5 : f32 to vector<32x8xf32>
    %7 = arith.maximumf %5, %6 : vector<32x8xf32>
    %c0_6 = arith.constant 0 : index
    %c0_7 = arith.constant 0 : index
    %8 = vector.load %arg4[%c0_6, %c0_7] : memref<32x32xf32, #tpu.memory_space<vmem>>, vector<32x32xf32>
    %c0_8 = arith.constant 0 : index
    %c0_9 = arith.constant 0 : index
    %9 = vector.load %arg5[%c0_8, %c0_9] : memref<32x1xf32, #tpu.memory_space<vmem>>, vector<32x1xf32>
    %cst_10 = arith.constant dense<0.000000e+00> : vector<32x8xf32>
    %10 = tpu.matmul %8, %7, %cst_10 {dimension_numbers = #tpu.dot_dimension_numbers<[1], [0], [0], [1], [0, 0, 1, 1], [], []>} : vector<32x32xf32>, vector<32x8xf32>, vector<32x8xf32> -> vector<32x8xf32>
    %11 = vector.broadcast %9 : vector<32x1xf32> to vector<32x8xf32>
    %12 = arith.addf %10, %11 : vector<32x8xf32>
    %cst_11 = arith.constant 0.000000e+00 : f32
    %13 = vector.broadcast %cst_11 : f32 to vector<32x8xf32>
    %14 = arith.maximumf %12, %13 : vector<32x8xf32>
    %c0_12 = arith.constant 0 : index
    %c0_13 = arith.constant 0 : index
    %15 = vector.load %arg6[%c0_12, %c0_13] : memref<4x32xf32, #tpu.memory_space<vmem>>, vector<4x32xf32>
    %c0_14 = arith.constant 0 : index
    %c0_15 = arith.constant 0 : index
    %16 = vector.load %arg7[%c0_14, %c0_15] : memref<4x1xf32, #tpu.memory_space<vmem>>, vector<4x1xf32>
    %cst_16 = arith.constant dense<0.000000e+00> : vector<4x8xf32>
    %17 = tpu.matmul %15, %14, %cst_16 {dimension_numbers = #tpu.dot_dimension_numbers<[1], [0], [0], [1], [0, 0, 1, 1], [], []>} : vector<4x32xf32>, vector<32x8xf32>, vector<4x8xf32> -> vector<4x8xf32>
    %18 = vector.broadcast %16 : vector<4x1xf32> to vector<4x8xf32>
    %19 = arith.addf %17, %18 : vector<4x8xf32>
    %c0_17 = arith.constant 0 : index
    %c0_18 = arith.constant 0 : index
    %20 = vector.load %arg8[%c0_17, %c0_18] : memref<4x8xf32, #tpu.memory_space<vmem>>, vector<4x8xf32>
    tpu.vector_store %arg8[%c0_17, %c0_18], %19 {strides = array<i32>} : memref<4x8xf32, #tpu.memory_space<vmem>>, vector<4x8xf32>,
    return
  }
  func.func @transform_0(%arg0: i32) -> (i32, i32) {
    %c0_i32 = arith.constant 0 : i32
    %c0_i32_0 = arith.constant 0 : i32
    return %arg0, %c0_i32 : i32, i32
  }
  func.func @transform_1(%arg0: i32) -> (i32, i32) {
    %c0_i32 = arith.constant 0 : i32
    %c0_i32_0 = arith.constant 0 : i32
    %c0_i32_1 = arith.constant 0 : i32
    return %c0_i32, %c0_i32_0 : i32, i32
  }
  func.func @transform_2(%arg0: i32) -> (i32, i32) {
    %c0_i32 = arith.constant 0 : i32
    %c0_i32_0 = arith.constant 0 : i32
    %c0_i32_1 = arith.constant 0 : i32
    return %c0_i32, %c0_i32_0 : i32, i32
  }
  func.func @transform_3(%arg0: i32) -> (i32, i32) {
    %c0_i32 = arith.constant 0 : i32
    %c0_i32_0 = arith.constant 0 : i32
    %c0_i32_1 = arith.constant 0 : i32
    return %c0_i32, %c0_i32_0 : i32, i32
  }
  func.func @transform_4(%arg0: i32) -> (i32, i32) {
    %c0_i32 = arith.constant 0 : i32
    %c0_i32_0 = arith.constant 0 : i32
    %c0_i32_1 = arith.constant 0 : i32
    return %c0_i32, %c0_i32_0 : i32, i32
  }
  func.func @transform_5(%arg0: i32) -> (i32, i32) {
    %c0_i32 = arith.constant 0 : i32
    %c0_i32_0 = arith.constant 0 : i32
    %c0_i32_1 = arith.constant 0 : i32
    return %c0_i32, %c0_i32_0 : i32, i32
  }
  func.func @transform_6(%arg0: i32) -> (i32, i32) {
    %c0_i32 = arith.constant 0 : i32
    %c0_i32_0 = arith.constant 0 : i32
    %c0_i32_1 = arith.constant 0 : i32
    return %c0_i32, %c0_i32_0 : i32, i32
  }
  func.func @transform_7(%arg0: i32) -> (i32, i32) {
    %c0_i32 = arith.constant 0 : i32
    %c0_i32_0 = arith.constant 0 : i32
    return %c0_i32, %arg0 : i32, i32
  }
}

</mosaic_0001>

<llo_original>
// kernel: tpu_custom_call.1
$region0: #{tpu_custom_call.1}
  #allocation0 [shape = 'u32[]', space=smem, size = 0x4, offset = 0x4, fixed_abs, tag = 'smem constant byte address 0x4 - core index']
  #allocation1 [shape = 'u32[144,128]{1,0:T(1,128)}', space=vmem, size = 0x12000, scoped, tag = 'internal scratch']
  %s0 = inlined_call_operand.vmem [shape: f32[8,16], index: 0, kind: input, shape index: {}]
  %s1 = inlined_call_operand.vmem [shape: f32[32,16], index: 1, kind: input, shape index: {}]
  %s2 = inlined_call_operand.vmem [shape: f32[32,1], index: 2, kind: input, shape index: {}]
  %s3 = inlined_call_operand.vmem [shape: f32[32,32], index: 3, kind: input, shape index: {}]
  %s4 = inlined_call_operand.vmem [shape: f32[32,1], index: 4, kind: input, shape index: {}]
  %s5 = inlined_call_operand.vmem [shape: f32[4,32], index: 5, kind: input, shape index: {}]
  %s6 = inlined_call_operand.vmem [shape: f32[4,1], index: 6, kind: input, shape index: {}]
  %s7 = inlined_call_operand.hbm [shape: f32[4,8], index: 7, kind: output, shape index: {}]
  %s8 = sld [smem:[#allocation0]]
  $region38: #{tpu_custom_call.1} parent=0
    _
  %s10 = ssub.s32 1, %s8
  %s11 = scalar_select 0, %s10, %s8
  $region1: #{tpu_custom_call.1} parent=0
    #allocation2 [shape = 'u8[2048]{0}', space=vmem, size = 0x800, scoped, tag = 'output window, operand 0, single buffered']
    #allocation3 [shape = 's32[1]{0}', space=sflag, size = 0x4, scoped, tag = 'scoped memory for tpu_custom_call.1']
    %12 = vsyncpa [#allocation3], 0
    // Predicated region
    $region2: #{tpu_custom_call.1} parent=1 // pred_check
      _
    $region3: #{tpu_custom_call.1} parent=1 // pred_check_branch
      %14 = sbr.rel (0) target = $region5
    $region4: #{tpu_custom_call.1} parent=1 // pred_region
      _
    $region5: #{tpu_custom_call.1} parent=1 // pred_fallthru
      _
    // Predicated region
    $region6: #{tpu_custom_call.1} parent=1 // pred_check
      _
    $region7: #{tpu_custom_call.1} parent=1 // pred_check_branch
      %16 = sbr.rel (0) target = $region9
    $region8: #{tpu_custom_call.1} parent=1 // pred_region
      _
    $region9: #{tpu_custom_call.1} parent=1 // pred_fallthru
      _
    // Predicated region
    $region10: #{tpu_custom_call.1} parent=1 // pred_check
      _
    $region11: #{tpu_custom_call.1} parent=1 // pred_check_branch
      %18 = sbr.rel (0) target = $region13
    $region12: #{tpu_custom_call.1} parent=1 // pred_region
      _
    $region13: #{tpu_custom_call.1} parent=1 // pred_fallthru
      _
    // Predicated region
    $region14: #{tpu_custom_call.1} parent=1 // pred_check
      _
    $region15: #{tpu_custom_call.1} parent=1 // pred_check_branch
      %20 = sbr.rel (0) target = $region17
    $region16: #{tpu_custom_call.1} parent=1 // pred_region
      _
    $region17: #{tpu_custom_call.1} parent=1 // pred_fallthru
      _
    // Predicated region
    $region18: #{tpu_custom_call.1} parent=1 // pred_check
      _
    $region19: #{tpu_custom_call.1} parent=1 // pred_check_branch
      %22 = sbr.rel (0) target = $region21
    $region20: #{tpu_custom_call.1} parent=1 // pred_region
      _
    $region21: #{tpu_custom_call.1} parent=1 // pred_fallthru
      _
    // Predicated region
    $region22: #{tpu_custom_call.1} parent=1 // pred_check
      _
    $region23: #{tpu_custom_call.1} parent=1 // pred_check_branch
      %24 = sbr.rel (0) target = $region25
    $region24: #{tpu_custom_call.1} parent=1 // pred_region
      _
    $region25: #{tpu_custom_call.1} parent=1 // pred_fallthru
      _
    // Predicated region
    $region26: #{tpu_custom_call.1} parent=1 // pred_check
      _
    $region27: #{tpu_custom_call.1} parent=1 // pred_check_branch
      %26 = sbr.rel (0) target = $region29
    $region28: #{tpu_custom_call.1} parent=1 // pred_region
      _
    $region29: #{tpu_custom_call.1} parent=1 // pred_fallthru
      _
    %v27 = vld [vmem:[%s1] sm:$0xff]
    %v28 = vld [vmem:[%s1 + $0x8] sm:$0xff]
    %v29 = vld [vmem:[%s1 + $0x10] sm:$0xff]
    %v30 = vld [vmem:[%s1 + $0x18] sm:$0xff]
    %v31 = vld [vmem:[%s0] sm:$0xff]
    %v32 = vld [vmem:[%s2] sm:$0xff]
    %v33 = vld [vmem:[%s2 + $0x8] sm:$0xff]
    %v34 = vld [vmem:[%s2 + $0x10] sm:$0xff]
    %v35 = vld [vmem:[%s2 + $0x18] sm:$0xff]
    %37 = vset.pattern.permute.xlu0 0
    %38 = vperm.xlu0 %37, %v32
    %v39 = vpop.permute.xlu0 %38
    %42 = vset.pattern.permute.xlu0 0
    %43 = vperm.xlu0 %42, %v33
    %v44 = vpop.permute.xlu0 %43
    %47 = vset.pattern.permute.xlu0 0
    %48 = vperm.xlu0 %47, %v34
    %v49 = vpop.permute.xlu0 %48
    %52 = vset.pattern.permute.xlu0 0
    %53 = vperm.xlu0 %52, %v35
    %v54 = vpop.permute.xlu0 %53
    %vm56 = vcmask 130048
    %v58 = vsel %vm56, %v27, 0
    %v61 = vsel %vm56, %v28, 0
    %v64 = vsel %vm56, %v29, 0
    %v67 = vsel %vm56, %v30, 0
    %v70 = vsel %vm56, %v31, 0
    %72 = vmatprep.subr.mxu0 0.0
    %73 = vmatpush1.xpose.msra.mxu0 %v70
    %74 = vmatprep.subr.mxu0 0.0
    %75 = vmatpush1.xpose.msra.mxu0 0.0
    %76 = vmatprep.subr.mxu0 0.0
    %77 = vmatpush1.xpose.msra.mxu0 0.0
    %78 = vmatprep.subr.mxu0 0.0
    %79 = vmatpush1.xpose.msra.mxu0 0.0
    %80 = vmatprep.subr.mxu0 0.0
    %81 = vmatpush1.xpose.msra.mxu0 0.0
    %82 = vmatprep.subr.mxu0 0.0
    %83 = vmatpush1.xpose.msra.mxu0 0.0
    %84 = vmatprep.subr.mxu0 0.0
    %85 = vmatpush1.xpose.msra.mxu0 0.0
    %86 = vmatprep.subr.mxu0 0.0
    %87 = vmatpush1.xpose.msra.mxu0 0.0
    %88 = vmatprep.subr.mxu0 0.0
    %89 = vmatpush1.xpose.msra.mxu0 0.0
    %90 = vmatprep.subr.mxu0 0.0
    %91 = vmatpush1.xpose.msra.mxu0 0.0
    %92 = vmatprep.subr.mxu0 0.0
    %93 = vmatpush1.xpose.msra.mxu0 0.0
    %94 = vmatprep.subr.mxu0 0.0
    %95 = vmatpush1.xpose.msra.mxu0 0.0
    %96 = vmatprep.subr.mxu0 0.0
    %97 = vmatpush1.xpose.msra.mxu0 0.0
    %98 = vmatprep.subr.mxu0 0.0
    %99 = vmatpush1.xpose.msra.mxu0 0.0
    %100 = vmatprep.subr.mxu0 0.0
    %101 = vmatpush1.xpose.msra.mxu0 0.0
    %102 = vmatprep.subr.mxu0 0.0
    %103 = vmatpush1.xpose.msra.mxu0 0.0
    %104 = vmatprep.subr.mxu0 0.0
    %105 = vmatpush1.xpose.msra.mxu0 0.0
    %106 = vmatprep.subr.mxu0 0.0
    %107 = vmatpush1.xpose.msra.mxu0 0.0
    %108 = vmatprep.subr.mxu0 0.0
    %109 = vmatpush1.xpose.msra.mxu0 0.0
    %110 = vmatprep.subr.mxu0 0.0
    %111 = vmatpush1.xpose.msra.mxu0 0.0
    %112 = vmatprep.subr.mxu0 0.0
    %113 = vmatpush1.xpose.msra.mxu0 0.0
    %114 = vmatprep.subr.mxu0 0.0
    %115 = vmatpush1.xpose.msra.mxu0 0.0
    %116 = vmatprep.subr.mxu0 0.0
    %117 = vmatpush1.xpose.msra.mxu0 0.0
    %118 = vmatprep.subr.mxu0 0.0
    %119 = vmatpush1.xpose.msra.mxu0 0.0
    %120 = vmatprep.subr.mxu0 0.0
    %121 = vmatpush1.xpose.msra.mxu0 0.0
    %122 = vmatprep.subr.mxu0 0.0
    %123 = vmatpush1.xpose.msra.mxu0 0.0
    %124 = vmatprep.subr.mxu0 0.0
    %125 = vmatpush1.xpose.msra.mxu0 0.0
    %126 = vmatprep.subr.mxu0 0.0
    %127 = vmatpush1.xpose.msra.mxu0 0.0
    %128 = vmatprep.subr.mxu0 0.0
    %129 = vmatpush1.xpose.msra.mxu0 0.0
    %130 = vmatprep.subr.mxu0 0.0
    %131 = vmatpush1.xpose.msra.mxu0 0.0
    %132 = vmatprep.subr.mxu0 0.0
    %133 = vmatpush1.xpose.msra.mxu0 0.0
    %134 = vmatprep.subr.mxu0 0.0
    %135 = vmatpush1.xpose.msra.mxu0 0.0
    %136 = vmatprep.mubr.f32.mxu0 0.0
    %137 = vmatmul.mubr.f32.gmra.mrb[0].mxu0 %v58
    %v138 = vpop.f32.mrb[0].mxu0
    %v139 = vadd.f32 %v39, %v138
    %v140 = vpop.f32.mrb[0].mxu0
    %141 = vmatprep.mubr.f32.mxu0 0.0
    %142 = vmatmul.mubr.f32.gmra.mrb[0].mxu0 %v61
    %v143 = vpop.f32.mrb[0].mxu0
    %v144 = vadd.f32 %v44, %v143
    %v145 = vpop.f32.mrb[0].mxu0
    %146 = vmatprep.mubr.f32.mxu0 0.0
    %147 = vmatmul.mubr.f32.gmra.mrb[0].mxu0 %v64
    %v148 = vpop.f32.mrb[0].mxu0
    %v149 = vadd.f32 %v49, %v148
    %v150 = vpop.f32.mrb[0].mxu0
    %151 = vmatprep.mubr.f32.mxu0 0.0
    %152 = vmatmul.mubr.f32.gmra.mrb[0].mxu0 %v67
    %v153 = vpop.f32.mrb[0].mxu0
    %v154 = vadd.f32 %v54, %v153
    %v155 = vpop.f32.mrb[0].mxu0
    %156 = vdwg.mxu0
    %v157 = vmax.f32 %v139, 0.0
    %v158 = vmax.f32 %v144, 0.0
    %v159 = vmax.f32 %v149, 0.0
    %v160 = vmax.f32 %v154, 0.0
    %v161 = vld [vmem:[%s3] sm:$0xff]
    %v162 = vld [vmem:[%s3 + $0x8] sm:$0xff]
    %v163 = vld [vmem:[%s3 + $0x10] sm:$0xff]
    %v164 = vld [vmem:[%s3 + $0x18] sm:$0xff]
    %v165 = vld [vmem:[%s4] sm:$0xff]
    %v166 = vld [vmem:[%s4 + $0x8] sm:$0xff]
    %v167 = vld [vmem:[%s4 + $0x10] sm:$0xff]
    %v168 = vld [vmem:[%s4 + $0x18] sm:$0xff]
    %170 = vset.pattern.permute.xlu0 0
    %171 = vperm.xlu0 %170, %v165
    %v172 = vpop.permute.xlu0 %171
    %175 = vset.pattern.permute.xlu0 0
    %176 = vperm.xlu0 %175, %v166
    %v177 = vpop.permute.xlu0 %176
    %180 = vset.pattern.permute.xlu0 0
    %181 = vperm.xlu0 %180, %v167
    %v182 = vpop.permute.xlu0 %181
    %185 = vset.pattern.permute.xlu0 0
    %186 = vperm.xlu0 %185, %v168
    %v187 = vpop.permute.xlu0 %186
    %vm189 = vcmask 261120
    %v191 = vsel %vm189, %v161, 0
    %v194 = vsel %vm189, %v162, 0
    %v197 = vsel %vm189, %v163, 0
    %v200 = vsel %vm189, %v164, 0
    %202 = vmatprep.subr.mxu0 0.0
    %203 = vmatpush1.msra.mxu0 %v157
    %204 = vmatprep.subr.mxu0 0.0
    %205 = vmatpush1.msra.mxu0 %v158
    %206 = vmatprep.subr.mxu0 0.0
    %207 = vmatpush1.msra.mxu0 %v159
    %208 = vmatprep.subr.mxu0 0.0
    %209 = vmatpush1.msra.mxu0 %v160
    %210 = vmatprep.subr.mxu0 0.0
    %211 = vmatpush1.msra.mxu0 0.0
    %212 = vmatprep.subr.mxu0 0.0
    %213 = vmatpush1.msra.mxu0 0.0
    %214 = vmatprep.subr.mxu0 0.0
    %215 = vmatpush1.msra.mxu0 0.0
    %216 = vmatprep.subr.mxu0 0.0
    %217 = vmatpush1.msra.mxu0 0.0
    %218 = vmatprep.subr.mxu0 0.0
    %219 = vmatpush1.msra.mxu0 0.0
    %220 = vmatprep.subr.mxu0 0.0
    %221 = vmatpush1.msra.mxu0 0.0
    %222 = vmatprep.subr.mxu0 0.0
    %223 = vmatpush1.msra.mxu0 0.0
    %224 = vmatprep.subr.mxu0 0.0
    %225 = vmatpush1.msra.mxu0 0.0
    %226 = vmatprep.subr.mxu0 0.0
    %227 = vmatpush1.msra.mxu0 0.0
    %228 = vmatprep.subr.mxu0 0.0
    %229 = vmatpush1.msra.mxu0 0.0
    %230 = vmatprep.subr.mxu0 0.0
    %231 = vmatpush1.msra.mxu0 0.0
    %232 = vmatprep.subr.mxu0 0.0
    %233 = vmatpush1.msra.mxu0 0.0
    %234 = vmatprep.subr.mxu0 0.0
    %235 = vmatpush1.msra.mxu0 0.0
    %236 = vmatprep.subr.mxu0 0.0
    %237 = vmatpush1.msra.mxu0 0.0
    %238 = vmatprep.subr.mxu0 0.0
    %239 = vmatpush1.msra.mxu0 0.0
    %240 = vmatprep.subr.mxu0 0.0
    %241 = vmatpush1.msra.mxu0 0.0
    %242 = vmatprep.subr.mxu0 0.0
    %243 = vmatpush1.msra.mxu0 0.0
    %244 = vmatprep.subr.mxu0 0.0
    %245 = vmatpush1.msra.mxu0 0.0
    %246 = vmatprep.subr.mxu0 0.0
    %247 = vmatpush1.msra.mxu0 0.0
    %248 = vmatprep.subr.mxu0 0.0
    %249 = vmatpush1.msra.mxu0 0.0
    %250 = vmatprep.subr.mxu0 0.0
    %251 = vmatpush1.msra.mxu0 0.0
    %252 = vmatprep.subr.mxu0 0.0
    %253 = vmatpush1.msra.mxu0 0.0
    %254 = vmatprep.subr.mxu0 0.0
    %255 = vmatpush1.msra.mxu0 0.0
    %256 = vmatprep.subr.mxu0 0.0
    %257 = vmatpush1.msra.mxu0 0.0
    %258 = vmatprep.subr.mxu0 0.0
    %259 = vmatpush1.msra.mxu0 0.0
    %260 = vmatprep.subr.mxu0 0.0
    %261 = vmatpush1.msra.mxu0 0.0
    %262 = vmatprep.subr.mxu0 0.0
    %263 = vmatpush1.msra.mxu0 0.0
    %264 = vmatprep.subr.mxu0 0.0
    %265 = vmatpush1.msra.mxu0 0.0
    %266 = vmatprep.mubr.f32.mxu0 0.0
    %267 = vmatmul.mubr.f32.gmra.mrb[0].mxu0 %v191
    %v268 = vpop.f32.mrb[0].mxu0
    %v269 = vadd.f32 %v172, %v268
    %v270 = vpop.f32.mrb[0].mxu0
    %271 = vmatprep.mubr.f32.mxu0 0.0
    %272 = vmatmul.mubr.f32.gmra.mrb[0].mxu0 %v194
    %v273 = vpop.f32.mrb[0].mxu0
    %v274 = vadd.f32 %v177, %v273
    %v275 = vpop.f32.mrb[0].mxu0
    %276 = vmatprep.mubr.f32.mxu0 0.0
    %277 = vmatmul.mubr.f32.gmra.mrb[0].mxu0 %v197
    %v278 = vpop.f32.mrb[0].mxu0
    %v279 = vadd.f32 %v182, %v278
    %v280 = vpop.f32.mrb[0].mxu0
    %281 = vmatprep.mubr.f32.mxu0 0.0
    %282 = vmatmul.mubr.f32.gmra.mrb[0].mxu0 %v200
    %v283 = vpop.f32.mrb[0].mxu0
    %v284 = vadd.f32 %v187, %v283
    %v285 = vpop.f32.mrb[0].mxu0
    %286 = vdwg.mxu0
    %v287 = vmax.f32 %v269, 0.0
    %v288 = vmax.f32 %v274, 0.0
    %v289 = vmax.f32 %v279, 0.0
    %v290 = vmax.f32 %v284, 0.0
    %v291 = vld [vmem:[%s5] sm:$0xf]
    %v292 = vld [vmem:[%s6] sm:$0xf]
    %294 = vset.pattern.permute.xlu0 0
    %295 = vperm.xlu0 %294, %v292
    %v296 = vpop.permute.xlu0 %295
    %v299 = vsel %vm189, %v291, 0
    %301 = vmatprep.subr.mxu0 0.0
    %302 = vmatpush1.msra.mxu0 %v287
    %303 = vmatprep.subr.mxu0 0.0
    %304 = vmatpush1.msra.mxu0 %v288
    %305 = vmatprep.subr.mxu0 0.0
    %306 = vmatpush1.msra.mxu0 %v289
    %307 = vmatprep.subr.mxu0 0.0
    %308 = vmatpush1.msra.mxu0 %v290
    %309 = vmatprep.subr.mxu0 0.0
    %310 = vmatpush1.msra.mxu0 0.0
    %311 = vmatprep.subr.mxu0 0.0
    %312 = vmatpush1.msra.mxu0 0.0
    %313 = vmatprep.subr.mxu0 0.0
    %314 = vmatpush1.msra.mxu0 0.0
    %315 = vmatprep.subr.mxu0 0.0
    %316 = vmatpush1.msra.mxu0 0.0
    %317 = vmatprep.subr.mxu0 0.0
    %318 = vmatpush1.msra.mxu0 0.0
    %319 = vmatprep.subr.mxu0 0.0
    %320 = vmatpush1.msra.mxu0 0.0
    %321 = vmatprep.subr.mxu0 0.0
    %322 = vmatpush1.msra.mxu0 0.0
    %323 = vmatprep.subr.mxu0 0.0
    %324 = vmatpush1.msra.mxu0 0.0
    %325 = vmatprep.subr.mxu0 0.0
    %326 = vmatpush1.msra.mxu0 0.0
    %327 = vmatprep.subr.mxu0 0.0
    %328 = vmatpush1.msra.mxu0 0.0
    %329 = vmatprep.subr.mxu0 0.0
    %330 = vmatpush1.msra.mxu0 0.0
    %331 = vmatprep.subr.mxu0 0.0
    %332 = vmatpush1.msra.mxu0 0.0
    %333 = vmatprep.subr.mxu0 0.0
    %334 = vmatpush1.msra.mxu0 0.0
    %335 = vmatprep.subr.mxu0 0.0
    %336 = vmatpush1.msra.mxu0 0.0
    %337 = vmatprep.subr.mxu0 0.0
    %338 = vmatpush1.msra.mxu0 0.0
    %339 = vmatprep.subr.mxu0 0.0
    %340 = vmatpush1.msra.mxu0 0.0
    %341 = vmatprep.subr.mxu0 0.0
    %342 = vmatpush1.msra.mxu0 0.0
    %343 = vmatprep.subr.mxu0 0.0
    %344 = vmatpush1.msra.mxu0 0.0
    %345 = vmatprep.subr.mxu0 0.0
    %346 = vmatpush1.msra.mxu0 0.0
    %347 = vmatprep.subr.mxu0 0.0
    %348 = vmatpush1.msra.mxu0 0.0
    %349 = vmatprep.subr.mxu0 0.0
    %350 = vmatpush1.msra.mxu0 0.0
    %351 = vmatprep.subr.mxu0 0.0
    %352 = vmatpush1.msra.mxu0 0.0
    %353 = vmatprep.subr.mxu0 0.0
    %354 = vmatpush1.msra.mxu0 0.0
    %355 = vmatprep.subr.mxu0 0.0
    %356 = vmatpush1.msra.mxu0 0.0
    %357 = vmatprep.subr.mxu0 0.0
    %358 = vmatpush1.msra.mxu0 0.0
    %359 = vmatprep.subr.mxu0 0.0
    %360 = vmatpush1.msra.mxu0 0.0
    %361 = vmatprep.subr.mxu0 0.0
    %362 = vmatpush1.msra.mxu0 0.0
    %363 = vmatprep.subr.mxu0 0.0
    %364 = vmatpush1.msra.mxu0 0.0
    %365 = vmatprep.mubr.f32.mxu0 0.0
    %366 = vmatmul.mubr.f32.gmra.mrb[0].mxu0 %v299
    %v367 = vpop.f32.mrb[0].mxu0
    %v368 = vadd.f32 %v296, %v367
    %v369 = vpop.f32.mrb[0].mxu0
    %370 = vdwg.mxu0
    %vm371 = vcmask 60416
    %372 = vst.msk [vmem:[#allocation2] sm:$0xf] %vm371, %v368
    // Predicated region
    $region30: #{tpu_custom_call.1} parent=1 // pred_check
      _
    $region31: #{tpu_custom_call.1} parent=1 // pred_check_branch
      %374 = sbr.rel (0) target = $region33
    $region32: #{tpu_custom_call.1} parent=1 // pred_region
      %s376 = ssub.s32 64, 64
      %377 = vsyncadd [#allocation3], %s376
      %s379 = sshll.u32 [#allocation2], 4
      %s380 = int_to_ptr.vmem [resolvable:$true] %s379
      %382 = dma.vmem_to_hbm [thread:$0]  %s380, 64, %s7, [#allocation3]
    $region33: #{tpu_custom_call.1} parent=1 // pred_fallthru
      _
    // Predicated region
    $region34: #{tpu_custom_call.1} parent=1 // pred_check
      _
    $region35: #{tpu_custom_call.1} parent=1 // pred_check_branch
      %384 = sbr.rel (0) target = $region37
    $region36: #{tpu_custom_call.1} parent=1 // pred_region
      %385 = dma.done [#allocation3], 64
    $region37: #{tpu_custom_call.1} parent=1 // pred_fallthru
      _
    %386 = vsyncpa [#allocation3], 1

</llo_original>
